<compile_context>
chip_gen: v7x
topology: tpu7x:2x2x1
jax: 0.10.0
libtpu: 0.0.40
codegen_flags: <defaults>
</compile_context>

<pallas_src>
import jax
import jax.numpy as jnp
from jax import lax
from jax.experimental import pallas as pl
from jax.experimental.pallas import tpu as pltpu


def _gated_attn_kernel(x_ref, wab_ref, bab_ref, wct_ref, bct_ref, A_ref):
    D = wct_ref.shape[1]          # Wc stored transposed: (C, D)
    act_dtype = x_ref.dtype       # bf16 on the default path, f32 otherwise

    x = x_ref[...]

    # Fused gate projection: one MXU pass over x for both branches, f32 accum.
    ab = (jnp.dot(x, wab_ref[...], preferred_element_type=jnp.float32)
          + bab_ref[...])
    ab = ab.astype(act_dtype)     # activations in compute dtype (bf16 EUP on v6e/v7x)

    a = jnp.tanh(ab[:, :D])                       # attention_a: Tanh
    # sigmoid(z) == 0.5 * tanh(0.5 * z) + 0.5  -> one EUP op, no divide.
    b = 0.5 * jnp.tanh(0.5 * ab[:, D:]) + 0.5     # attention_b: Sigmoid
    gated = a * b                                  # (tile_n, D)

    # Lane-dense projection: (C, D) x (tile_n, D) contracted on D -> (C, tile_n).
    # Output tile is 128-lane dense along tile_n -> unmasked stores.
    At = lax.dot_general(
        wct_ref[...], gated,
        dimension_numbers=(((1,), (1,)), ((), ())),
        preferred_element_type=jnp.float32) + bct_ref[...]

    A_ref[...] = At.astype(A_ref.dtype)


def _vmem_budget_bytes():
    """Per-step working-set target derived from the chip's VMEM capacity."""
    try:
        cap = pltpu.get_tpu_info().vmem_capacity_bytes
    except Exception:
        cap = 64 * 1024 * 1024   # conservative: v7x per-TC capacity
    # ~12-16 MiB per step: fits v7x (64 MiB/TC) with double-buffering headroom.
    return min(16 * 1024 * 1024, cap // 5)


def _pick_tile_n(N, L, D, itemsize):
    """Largest MXU-aligned row tile that keeps the per-step working set in budget."""
    budget = _vmem_budget_bytes()
    # Fixed cost: double-buffered fused [Wa|Wb] + small operands.
    fixed = 2 * (L * 2 * D) * itemsize + 4 * (2 * D) * 4
    # Per-row cost: double-buffered x tile, f32 ab, compute-dtype a/b/gated, output col.
    per_row = 2 * L * itemsize + (2 * D) * 4 + 3 * D * itemsize + 16
    tile = (budget - fixed) // max(per_row, 1)
    tile = int(max(256, min(tile, 2048)))
    tile = (tile // 256) * 256      # MXU-row / lane aligned (also multiple of 16 for bf16)
    if N <= tile:
        return N                    # full-extent block is always legal
    return tile


def _round_tile(tile_n, N):
    """Either full extent or a multiple of 256 (keeps blocks (8,128)-legal)."""
    if tile_n >= N:
        return N
    tile_n = max(256, (tile_n // 256) * 256)
    if tile_n >= N:
        return N
    return tile_n


def attn_net_gated(x, wa, ba, wb, bb, wc, bc, *, tile_n=None,
                   compute_dtype=jnp.bfloat16):
    """Fused gated-attention forward.

    x:  (N, L)
    wa, wb: (L, D)    (transposed vs. torch Linear.weight)
    ba, bb: (1, D)
    wc: (D, C), bc: (1, C)
    compute_dtype: dtype for the streamed x / weights (bf16 default; pass
                   jnp.float32 or None for full-precision numerics).
    Returns (A, x) with A: (N, C), mirroring the PyTorch module.
    """
    N, L = x.shape
    D = wa.shape[1]
    C = wc.shape[1]
    out_dtype = x.dtype
    if compute_dtype is None:
        compute_dtype = x.dtype

    # Fuse the two gate projections once in the wrapper (XLA does this once,
    # not per-tile). Biases stay f32 (added to the f32 accumulator).
    wab = jnp.concatenate([wa, wb], axis=1).astype(compute_dtype)   # (L, 2D)
    bab = jnp.concatenate([ba, bb], axis=1).astype(jnp.float32)     # (1, 2D)
    wct = jnp.transpose(wc).astype(compute_dtype)                   # (C, D)
    bct = jnp.transpose(bc).astype(jnp.float32)                     # (C, 1)
    x_in = x.astype(compute_dtype)

    itemsize = jnp.dtype(compute_dtype).itemsize
    if tile_n is None:
        tile_n = _pick_tile_n(N, L, D, itemsize)
    tile_n = _round_tile(int(tile_n), N)
    grid = (pl.cdiv(N, tile_n),)

    cost = pl.CostEstimate(
        flops=2 * N * L * (2 * D) + 2 * N * D * C,
        transcendentals=2 * N * D,
        bytes_accessed=(x_in.size * itemsize
                        + wab.size * itemsize + wct.size * itemsize
                        + (bab.size + bct.size) * 4
                        + N * C * jnp.dtype(out_dtype).itemsize),
    )

    # NOTE: constant-index weight specs could use pipeline_mode=pl.Buffered(1)
    # to drop their second buffer (~1 MiB); omitted here as the VMEM budget
    # already leaves ample headroom on 64 MiB parts.
    A_t = pl.pallas_call(
        _gated_attn_kernel,
        out_shape=jax.ShapeDtypeStruct((C, N), out_dtype),   # lane-dense along N
        grid=grid,
        in_specs=[
            pl.BlockSpec((tile_n, L), lambda i: (i, 0)),     # x: streamed over N
            pl.BlockSpec((L, 2 * D), lambda i: (0, 0)),      # [Wa|Wb]: VMEM-resident
            pl.BlockSpec((1, 2 * D), lambda i: (0, 0)),      # [ba|bb]
            pl.BlockSpec((C, D), lambda i: (0, 0)),          # Wc^T
            pl.BlockSpec((C, 1), lambda i: (0, 0)),          # bc^T
        ],
        out_specs=pl.BlockSpec((C, tile_n), lambda i: (0, i)),
        compiler_params=pltpu.CompilerParams(
            dimension_semantics=("parallel",),               # shard row tiles across TCs
            vmem_limit_bytes=40 * 1024 * 1024,
        ),
        cost_estimate=cost,
    )(x_in, wab, bab, wct, bct)

    A = jnp.transpose(A_t)   # back to (N, C) to match the PyTorch contract
    return A, x


if __name__ == "__main__":
    key = jax.random.PRNGKey(0)

    def make_params(k, L, D, C):
        kwa, kba, kwb, kbb, kwc, kbc = jax.random.split(k, 6)
        s = 1.0 / jnp.sqrt(L)
        wa = jax.random.uniform(kwa, (L, D), jnp.float32, -1.0, 1.0) * s
        ba = jax.random.uniform(kba, (1, D), jnp.float32, -1.0, 1.0) * s
        wb = jax.random.uniform(kwb, (L, D), jnp.float32, -1.0, 1.0) * s
        bb = jax.random.uniform(kbb, (1, D), jnp.float32, -1.0, 1.0) * s
        sc = 1.0 / jnp.sqrt(D)
        wc = jax.random.uniform(kwc, (D, C), jnp.float32, -1.0, 1.0) * sc
        bc = jax.random.uniform(kbc, (1, C), jnp.float32, -1.0, 1.0) * sc
        return wa, ba, wb, bb, wc, bc

    def reference(x, wa, ba, wb, bb, wc, bc):
        a = jnp.tanh(x @ wa + ba)
        b = jax.nn.sigmoid(x @ wb + bb)
        return (a * b) @ wc + bc

    # Test 1: module-default style (n_classes=1), single full-extent tile,
    # f32 compute path -> tight tolerance against the reference.
    k1, k2, key = jax.random.split(key, 3)
    N, L, D, C = 8, 32, 16, 1
    x = jax.random.normal(k1, (N, L), dtype=jnp.float32)
    params = make_params(k2, L, D, C)
    A, x_out = attn_net_gated(x, *params, compute_dtype=jnp.float32)
    jax.block_until_ready((A, x_out))
    A_ref = reference(x, *params)
    assert A.shape == (N, C)
    assert jnp.allclose(A, A_ref, atol=1e-4, rtol=1e-4)
    assert jnp.array_equal(x_out, x)

    # Test 2: default bf16 path, multi-step grid with a partial last tile and
    # n_classes > 1 (lane-dense (C, tile_n) output path).
    k1, k2, key = jax.random.split(key, 3)
    N, L, D, C = 300, 128, 64, 2
    x = jax.random.normal(k1, (N, L), dtype=jnp.float32)
    params = make_params(k2, L, D, C)
    A, x_out = attn_net_gated(x, *params, tile_n=256)   # bf16 default
    jax.block_until_ready((A, x_out))
    A_ref = reference(x, *params)
    assert A.shape == (N, C)
    assert jnp.allclose(A, A_ref, atol=5e-2, rtol=5e-2)   # bf16 streaming numerics
    assert jnp.array_equal(x_out, x)

    print("KERNEL_OK")
</pallas_src>

<mosaic_0001>
module attributes {stable_mosaic.version = 11 : i64} {
  func.func @_gated_attn_kernel(%arg0: i32, %arg1: memref<8x32xf32, #tpu.memory_space<vmem>>, %arg2: memref<32x32xf32, #tpu.memory_space<vmem>>, %arg3: memref<1x32xf32, #tpu.memory_space<vmem>>, %arg4: memref<1x16xf32, #tpu.memory_space<vmem>>, %arg5: memref<1x1xf32, #tpu.memory_space<vmem>>, %arg6: memref<1x8xf32, #tpu.memory_space<vmem>>) attributes {dimension_semantics = [#tpu.dimension_semantics<parallel>], iteration_bounds = array<i64: 1>, scalar_prefetch = 0 : i64, scratch_operands = 0 : i64, tpu.core_type = #tpu.core_type<tc>, window_params = [{transform_indices = @transform_0, window_bounds = array<i64: 8, 32>}, {pipeline_mode = #tpu.pipeline_mode<synchronous>, transform_indices = @transform_1, window_bounds = array<i64: 32, 32>}, {pipeline_mode = #tpu.pipeline_mode<synchronous>, transform_indices = @transform_2, window_bounds = array<i64: 1, 32>}, {pipeline_mode = #tpu.pipeline_mode<synchronous>, transform_indices = @transform_3, window_bounds = array<i64: 1, 16>}, {pipeline_mode = #tpu.pipeline_mode<synchronous>, transform_indices = @transform_4, window_bounds = array<i64: 1, 1>}, {transform_indices = @transform_5, window_bounds = array<i64: 1, 8>}]} {
    %c0 = arith.constant 0 : index
    %c0_0 = arith.constant 0 : index
    %0 = vector.load %arg1[%c0, %c0_0] : memref<8x32xf32, #tpu.memory_space<vmem>>, vector<8x32xf32>
    %c0_1 = arith.constant 0 : index
    %c0_2 = arith.constant 0 : index
    %1 = vector.load %arg2[%c0_1, %c0_2] : memref<32x32xf32, #tpu.memory_space<vmem>>, vector<32x32xf32>
    %cst = arith.constant dense<0.000000e+00> : vector<8x32xf32>
    %2 = tpu.matmul %0, %1, %cst {dimension_numbers = #tpu.dot_dimension_numbers<[1], [0], [0], [1], [0, 0, 1, 1], [], []>} : vector<8x32xf32>, vector<32x32xf32>, vector<8x32xf32> -> vector<8x32xf32>
    %c0_3 = arith.constant 0 : index
    %c0_4 = arith.constant 0 : index
    %3 = vector.load %arg3[%c0_3, %c0_4] : memref<1x32xf32, #tpu.memory_space<vmem>>, vector<1x32xf32>
    %4 = vector.broadcast %3 : vector<1x32xf32> to vector<8x32xf32>
    %5 = arith.addf %2, %4 : vector<8x32xf32>
    %6 = vector.extract_strided_slice %5 {offsets = [0, 0], sizes = [8, 16], strides = [1, 1]} : vector<8x32xf32> to vector<8x16xf32>
    %7 = math.tanh %6 : vector<8x16xf32>
    %8 = vector.extract_strided_slice %5 {offsets = [0, 16], sizes = [8, 16], strides = [1, 1]} : vector<8x32xf32> to vector<8x16xf32>
    %cst_5 = arith.constant 5.000000e-01 : f32
    %9 = vector.broadcast %cst_5 : f32 to vector<8x16xf32>
    %10 = arith.mulf %9, %8 : vector<8x16xf32>
    %11 = math.tanh %10 : vector<8x16xf32>
    %cst_6 = arith.constant 5.000000e-01 : f32
    %12 = vector.broadcast %cst_6 : f32 to vector<8x16xf32>
    %13 = arith.mulf %12, %11 : vector<8x16xf32>
    %cst_7 = arith.constant 5.000000e-01 : f32
    %14 = vector.broadcast %cst_7 : f32 to vector<8x16xf32>
    %15 = arith.addf %13, %14 : vector<8x16xf32>
    %16 = arith.mulf %7, %15 : vector<8x16xf32>
    %c0_8 = arith.constant 0 : index
    %c0_9 = arith.constant 0 : index
    %17 = vector.load %arg4[%c0_8, %c0_9] : memref<1x16xf32, #tpu.memory_space<vmem>>, vector<1x16xf32>
    %cst_10 = arith.constant dense<0.000000e+00> : vector<1x8xf32>
    %18 = tpu.matmul %17, %16, %cst_10 {dimension_numbers = #tpu.dot_dimension_numbers<[1], [1], [0], [0], [0, 0, 1, 0], [], []>} : vector<1x16xf32>, vector<8x16xf32>, vector<1x8xf32> -> vector<1x8xf32>
    %c0_11 = arith.constant 0 : index
    %c0_12 = arith.constant 0 : index
    %19 = vector.load %arg5[%c0_11, %c0_12] : memref<1x1xf32, #tpu.memory_space<vmem>>, vector<1x1xf32>
    %20 = vector.broadcast %19 : vector<1x1xf32> to vector<1x8xf32>
    %21 = arith.addf %18, %20 : vector<1x8xf32>
    %c0_13 = arith.constant 0 : index
    %c0_14 = arith.constant 0 : index
    %22 = vector.load %arg6[%c0_13, %c0_14] : memref<1x8xf32, #tpu.memory_space<vmem>>, vector<1x8xf32>
    tpu.vector_store %arg6[%c0_13, %c0_14], %21 {strides = array<i32>} : memref<1x8xf32, #tpu.memory_space<vmem>>, vector<1x8xf32>,
    return
  }
  func.func @transform_0(%arg0: i32) -> (i32, i32) {
    %c0_i32 = arith.constant 0 : i32
    %c0_i32_0 = arith.constant 0 : i32
    return %arg0, %c0_i32 : i32, i32
  }
  func.func @transform_1(%arg0: i32) -> (i32, i32) {
    %c0_i32 = arith.constant 0 : i32
    %c0_i32_0 = arith.constant 0 : i32
    %c0_i32_1 = arith.constant 0 : i32
    return %c0_i32, %c0_i32_0 : i32, i32
  }
  func.func @transform_2(%arg0: i32) -> (i32, i32) {
    %c0_i32 = arith.constant 0 : i32
    %c0_i32_0 = arith.constant 0 : i32
    %c0_i32_1 = arith.constant 0 : i32
    return %c0_i32, %c0_i32_0 : i32, i32
  }
  func.func @transform_3(%arg0: i32) -> (i32, i32) {
    %c0_i32 = arith.constant 0 : i32
    %c0_i32_0 = arith.constant 0 : i32
    %c0_i32_1 = arith.constant 0 : i32
    return %c0_i32, %c0_i32_0 : i32, i32
  }
  func.func @transform_4(%arg0: i32) -> (i32, i32) {
    %c0_i32 = arith.constant 0 : i32
    %c0_i32_0 = arith.constant 0 : i32
    %c0_i32_1 = arith.constant 0 : i32
    return %c0_i32, %c0_i32_0 : i32, i32
  }
  func.func @transform_5(%arg0: i32) -> (i32, i32) {
    %c0_i32 = arith.constant 0 : i32
    %c0_i32_0 = arith.constant 0 : i32
    return %c0_i32, %arg0 : i32, i32
  }
}

</mosaic_0001>

<llo_original>
// kernel: tpu_custom_call.1
$region0: #{tpu_custom_call.1}
  #allocation0 [shape = 'u32[]', space=smem, size = 0x4, offset = 0x4, fixed_abs, tag = 'smem constant byte address 0x4 - core index']
  #allocation1 [shape = 'u32[144,128]{1,0:T(1,128)}', space=vmem, size = 0x12000, scoped, tag = 'internal scratch']
  #allocation2 [shape = 'f32[1,1]{1,0:T(1,128)S(1)}', space=vmem, size = 0x200, scoped, tag = 'scoped memory for tpu_custom_call.1']
  %s0 = inlined_call_operand.hbm [shape: f32[8,32], index: 0, kind: input, shape index: {}]
  %s1 = inlined_call_operand.hbm [shape: f32[32,32], index: 1, kind: input, shape index: {}]
  %s2 = inlined_call_operand.vmem [shape: f32[1,32], index: 2, kind: input, shape index: {}]
  %s3 = inlined_call_operand.vmem [shape: f32[1,16], index: 3, kind: input, shape index: {}]
  %s4 = inlined_call_operand.<no memory space> [shape: f32[1,1], index: 4, kind: input, shape index: {}]
  %s5 = inlined_call_operand.hbm [shape: f32[1,8], index: 5, kind: output, shape index: {}]
  %s6 = sld [smem:[#allocation0]]
  $region38: #{tpu_custom_call.1} parent=0
    _
  %s8 = ssub.s32 1, %s6
  %s9 = scalar_select 0, %s8, %s6
  %v10 = vstv %s4
  %11 = vst [vmem:[#allocation2] sm:$0x1] %v10
  $region1: #{tpu_custom_call.1} parent=0
    #allocation3 [shape = 'u8[4096]{0}', space=vmem, size = 0x1000, scoped, tag = 'input window, operand 0, single buffered']
    #allocation4 [shape = 's32[1]{0}', space=sflag, size = 0x4, scoped, tag = 'scoped memory for tpu_custom_call.1']
    #allocation5 [shape = 's32[1]{0}', space=sflag, size = 0x4, scoped, tag = 'scoped memory for tpu_custom_call.1']
    #allocation6 [shape = 'u8[16384]{0}', space=vmem, size = 0x4000, scoped, tag = 'input window, operand 1, single buffered']
    #allocation7 [shape = 's32[1]{0}', space=sflag, size = 0x4, scoped, tag = 'scoped memory for tpu_custom_call.1']
    #allocation8 [shape = 'u8[512]{0}', space=vmem, size = 0x400, scoped, tag = 'output window, operand 0, single buffered']
    %12 = vsyncpa [#allocation4], 0
    %13 = vsyncpa [#allocation7], 0
    %14 = vsyncpa [#allocation5], 0
    // Predicated region
    $region2: #{tpu_custom_call.1} parent=1 // pred_check
      _
    $region3: #{tpu_custom_call.1} parent=1 // pred_check_branch
      %16 = sbr.rel (0) target = $region5
    $region4: #{tpu_custom_call.1} parent=1 // pred_region
      %s18 = ssub.s32 128, 128
      %19 = vsyncadd [#allocation4], %s18
      %s21 = sshll.u32 [#allocation3], 4
      %s22 = int_to_ptr.vmem [resolvable:$true] %s21
      %24 = dma.hbm_to_vmem [thread:$0]  %s0, 128, %s22, [#allocation4]
    $region5: #{tpu_custom_call.1} parent=1 // pred_fallthru
      _
    // Predicated region
    $region6: #{tpu_custom_call.1} parent=1 // pred_check
      _
    $region7: #{tpu_custom_call.1} parent=1 // pred_check_branch
      %26 = sbr.rel (0) target = $region9
    $region8: #{tpu_custom_call.1} parent=1 // pred_region
      %s28 = ssub.s32 512, 512
      %29 = vsyncadd [#allocation7], %s28
      %s30 = sshll.u32 [#allocation6], 4
      %s31 = int_to_ptr.vmem [resolvable:$true] %s30
      %36 = dma.hbm_to_vmem [thread:$0]  %s1, 512, %s31, [#allocation7], 128, 128, 8
    $region9: #{tpu_custom_call.1} parent=1 // pred_fallthru
      _
    // Predicated region
    $region10: #{tpu_custom_call.1} parent=1 // pred_check
      _
    $region11: #{tpu_custom_call.1} parent=1 // pred_check_branch
      %38 = sbr.rel (0) target = $region13
    $region12: #{tpu_custom_call.1} parent=1 // pred_region
      _
    $region13: #{tpu_custom_call.1} parent=1 // pred_fallthru
      _
    // Predicated region
    $region14: #{tpu_custom_call.1} parent=1 // pred_check
      _
    $region15: #{tpu_custom_call.1} parent=1 // pred_check_branch
      %40 = sbr.rel (0) target = $region17
    $region16: #{tpu_custom_call.1} parent=1 // pred_region
      _
    $region17: #{tpu_custom_call.1} parent=1 // pred_fallthru
      _
    // Predicated region
    $region18: #{tpu_custom_call.1} parent=1 // pred_check
      _
    $region19: #{tpu_custom_call.1} parent=1 // pred_check_branch
      %42 = sbr.rel (0) target = $region21
    $region20: #{tpu_custom_call.1} parent=1 // pred_region
      _
    $region21: #{tpu_custom_call.1} parent=1 // pred_fallthru
      _
    // Predicated region
    $region22: #{tpu_custom_call.1} parent=1 // pred_check
      _
    $region23: #{tpu_custom_call.1} parent=1 // pred_check_branch
      %44 = sbr.rel (0) target = $region25
    $region24: #{tpu_custom_call.1} parent=1 // pred_region
      %45 = dma.done [#allocation4], 128
    $region25: #{tpu_custom_call.1} parent=1 // pred_fallthru
      _
    // Predicated region
    $region26: #{tpu_custom_call.1} parent=1 // pred_check
      _
    $region27: #{tpu_custom_call.1} parent=1 // pred_check_branch
      %47 = sbr.rel (0) target = $region29
    $region28: #{tpu_custom_call.1} parent=1 // pred_region
      %48 = dma.done [#allocation7], 512
    $region29: #{tpu_custom_call.1} parent=1 // pred_fallthru
      _
    %v49 = vld [vmem:[#allocation3] sm:$0xff]
    %v50 = vld [vmem:[#allocation6] sm:$0xff]
    %v51 = vld [vmem:[#allocation6 + $0x8] sm:$0xff]
    %v52 = vld [vmem:[#allocation6 + $0x10] sm:$0xff]
    %v53 = vld [vmem:[#allocation6 + $0x18] sm:$0xff]
    %v54 = vld [vmem:[%s2] sm:$0x1]
    %v56 = vlaneseq
    %v57 = vshrl.u32 %v56, 7
    %v58 = vsub.s32 0, %v57
    %v59 = vrot.slane %v54, %v58
    %vm61 = vcmask 261120
    %v63 = vsel %vm61, %v49, 0
    %65 = vmatprep.subr.mxu0 0.0
    %66 = vmatpush1.msra.mxu0 %v50
    %67 = vmatprep.subr.mxu0 0.0
    %68 = vmatpush1.msra.mxu0 %v51
    %69 = vmatprep.subr.mxu0 0.0
    %70 = vmatpush1.msra.mxu0 %v52
    %71 = vmatprep.subr.mxu0 0.0
    %72 = vmatpush1.msra.mxu0 %v53
    %73 = vmatprep.subr.mxu0 0.0
    %74 = vmatpush1.msra.mxu0 0.0
    %75 = vmatprep.subr.mxu0 0.0
    %76 = vmatpush1.msra.mxu0 0.0
    %77 = vmatprep.subr.mxu0 0.0
    %78 = vmatpush1.msra.mxu0 0.0
    %79 = vmatprep.subr.mxu0 0.0
    %80 = vmatpush1.msra.mxu0 0.0
    %81 = vmatprep.subr.mxu0 0.0
    %82 = vmatpush1.msra.mxu0 0.0
    %83 = vmatprep.subr.mxu0 0.0
    %84 = vmatpush1.msra.mxu0 0.0
    %85 = vmatprep.subr.mxu0 0.0
    %86 = vmatpush1.msra.mxu0 0.0
    %87 = vmatprep.subr.mxu0 0.0
    %88 = vmatpush1.msra.mxu0 0.0
    %89 = vmatprep.subr.mxu0 0.0
    %90 = vmatpush1.msra.mxu0 0.0
    %91 = vmatprep.subr.mxu0 0.0
    %92 = vmatpush1.msra.mxu0 0.0
    %93 = vmatprep.subr.mxu0 0.0
    %94 = vmatpush1.msra.mxu0 0.0
    %95 = vmatprep.subr.mxu0 0.0
    %96 = vmatpush1.msra.mxu0 0.0
    %97 = vmatprep.subr.mxu0 0.0
    %98 = vmatpush1.msra.mxu0 0.0
    %99 = vmatprep.subr.mxu0 0.0
    %100 = vmatpush1.msra.mxu0 0.0
    %101 = vmatprep.subr.mxu0 0.0
    %102 = vmatpush1.msra.mxu0 0.0
    %103 = vmatprep.subr.mxu0 0.0
    %104 = vmatpush1.msra.mxu0 0.0
    %105 = vmatprep.subr.mxu0 0.0
    %106 = vmatpush1.msra.mxu0 0.0
    %107 = vmatprep.subr.mxu0 0.0
    %108 = vmatpush1.msra.mxu0 0.0
    %109 = vmatprep.subr.mxu0 0.0
    %110 = vmatpush1.msra.mxu0 0.0
    %111 = vmatprep.subr.mxu0 0.0
    %112 = vmatpush1.msra.mxu0 0.0
    %113 = vmatprep.subr.mxu0 0.0
    %114 = vmatpush1.msra.mxu0 0.0
    %115 = vmatprep.subr.mxu0 0.0
    %116 = vmatpush1.msra.mxu0 0.0
    %117 = vmatprep.subr.mxu0 0.0
    %118 = vmatpush1.msra.mxu0 0.0
    %119 = vmatprep.subr.mxu0 0.0
    %120 = vmatpush1.msra.mxu0 0.0
    %121 = vmatprep.subr.mxu0 0.0
    %122 = vmatpush1.msra.mxu0 0.0
    %123 = vmatprep.subr.mxu0 0.0
    %124 = vmatpush1.msra.mxu0 0.0
    %125 = vmatprep.subr.mxu0 0.0
    %126 = vmatpush1.msra.mxu0 0.0
    %127 = vmatprep.subr.mxu0 0.0
    %128 = vmatpush1.msra.mxu0 0.0
    %129 = vmatprep.mubr.f32.mxu0 0.0
    %130 = vmatmul.mubr.f32.gmra.mrb[0].mxu0 %v63
    %v131 = vpop.f32.mrb[0].mxu0
    %v132 = vadd.f32 %v59, %v131
    %v133 = vpop.f32.mrb[0].mxu0
    %134 = vdwg.mxu0
    %v135 = vtanh.pop %v132
    %v136 = vmul.f32 %v132, 0.5
    %v137 = vtanh.pop %v136
    %v138 = vmul.f32 %v137, 0.5
    %v139 = vadd.f32 %v138, 0.5
    %141 = vrot.lane.b32.xlu0 %v139, 112
    %v142 = vpop.permute.xlu0 %141
    %v144 = vmul.f32 %v135, %v142
    %v145 = vld [vmem:[%s3] sm:$0x1]
    %v146 = vld [vmem:[#allocation2] sm:$0x1]
    %148 = vset.pattern.permute.xlu0 0
    %149 = vperm.xlu0 %148, %v146
    %v150 = vpop.permute.xlu0 %149
    %v152 = vlaneseq
    %v153 = vshrl.u32 %v152, 7
    %v154 = vsub.s32 0, %v153
    %v155 = vrot.slane %v150, %v154
    %vm156 = vcmask 130048
    %v158 = vsel %vm156, %v145, 0
    %v161 = vsel %vm156, %v144, 0
    %163 = vmatprep.subr.mxu0 0.0
    %164 = vmatpush1.xpose.msra.mxu0 %v161
    %165 = vmatprep.subr.mxu0 0.0
    %166 = vmatpush1.xpose.msra.mxu0 0.0
    %167 = vmatprep.subr.mxu0 0.0
    %168 = vmatpush1.xpose.msra.mxu0 0.0
    %169 = vmatprep.subr.mxu0 0.0
    %170 = vmatpush1.xpose.msra.mxu0 0.0
    %171 = vmatprep.subr.mxu0 0.0
    %172 = vmatpush1.xpose.msra.mxu0 0.0
    %173 = vmatprep.subr.mxu0 0.0
    %174 = vmatpush1.xpose.msra.mxu0 0.0
    %175 = vmatprep.subr.mxu0 0.0
    %176 = vmatpush1.xpose.msra.mxu0 0.0
    %177 = vmatprep.subr.mxu0 0.0
    %178 = vmatpush1.xpose.msra.mxu0 0.0
    %179 = vmatprep.subr.mxu0 0.0
    %180 = vmatpush1.xpose.msra.mxu0 0.0
    %181 = vmatprep.subr.mxu0 0.0
    %182 = vmatpush1.xpose.msra.mxu0 0.0
    %183 = vmatprep.subr.mxu0 0.0
    %184 = vmatpush1.xpose.msra.mxu0 0.0
    %185 = vmatprep.subr.mxu0 0.0
    %186 = vmatpush1.xpose.msra.mxu0 0.0
    %187 = vmatprep.subr.mxu0 0.0
    %188 = vmatpush1.xpose.msra.mxu0 0.0
    %189 = vmatprep.subr.mxu0 0.0
    %190 = vmatpush1.xpose.msra.mxu0 0.0
    %191 = vmatprep.subr.mxu0 0.0
    %192 = vmatpush1.xpose.msra.mxu0 0.0
    %193 = vmatprep.subr.mxu0 0.0
    %194 = vmatpush1.xpose.msra.mxu0 0.0
    %195 = vmatprep.subr.mxu0 0.0
    %196 = vmatpush1.xpose.msra.mxu0 0.0
    %197 = vmatprep.subr.mxu0 0.0
    %198 = vmatpush1.xpose.msra.mxu0 0.0
    %199 = vmatprep.subr.mxu0 0.0
    %200 = vmatpush1.xpose.msra.mxu0 0.0
    %201 = vmatprep.subr.mxu0 0.0
    %202 = vmatpush1.xpose.msra.mxu0 0.0
    %203 = vmatprep.subr.mxu0 0.0
    %204 = vmatpush1.xpose.msra.mxu0 0.0
    %205 = vmatprep.subr.mxu0 0.0
    %206 = vmatpush1.xpose.msra.mxu0 0.0
    %207 = vmatprep.subr.mxu0 0.0
    %208 = vmatpush1.xpose.msra.mxu0 0.0
    %209 = vmatprep.subr.mxu0 0.0
    %210 = vmatpush1.xpose.msra.mxu0 0.0
    %211 = vmatprep.subr.mxu0 0.0
    %212 = vmatpush1.xpose.msra.mxu0 0.0
    %213 = vmatprep.subr.mxu0 0.0
    %214 = vmatpush1.xpose.msra.mxu0 0.0
    %215 = vmatprep.subr.mxu0 0.0
    %216 = vmatpush1.xpose.msra.mxu0 0.0
    %217 = vmatprep.subr.mxu0 0.0
    %218 = vmatpush1.xpose.msra.mxu0 0.0
    %219 = vmatprep.subr.mxu0 0.0
    %220 = vmatpush1.xpose.msra.mxu0 0.0
    %221 = vmatprep.subr.mxu0 0.0
    %222 = vmatpush1.xpose.msra.mxu0 0.0
    %223 = vmatprep.subr.mxu0 0.0
    %224 = vmatpush1.xpose.msra.mxu0 0.0
    %225 = vmatprep.subr.mxu0 0.0
    %226 = vmatpush1.xpose.msra.mxu0 0.0
    %227 = vmatprep.mubr.f32.mxu0 0.0
    %228 = vmatmul.mubr.f32.gmra.mrb[0].mxu0 %v158
    %v229 = vpop.f32.mrb[0].mxu0
    %v230 = vadd.f32 %v155, %v229
    %v231 = vpop.f32.mrb[0].mxu0
    %232 = vdwg.mxu0
    %vm233 = vcmask 57344
    %234 = vst.msk [vmem:[#allocation8] sm:$0x1] %vm233, %v230
    // Predicated region
    $region30: #{tpu_custom_call.1} parent=1 // pred_check
      _
    $region31: #{tpu_custom_call.1} parent=1 // pred_check_branch
      %236 = sbr.rel (0) target = $region33
    $region32: #{tpu_custom_call.1} parent=1 // pred_region
      %s238 = ssub.s32 16, 16
      %239 = vsyncadd [#allocation5], %s238
      %s241 = sshll.u32 [#allocation8], 4
      %s242 = int_to_ptr.vmem [resolvable:$true] %s241
      %244 = dma.vmem_to_hbm [thread:$0]  %s242, 16, %s5, [#allocation5]
    $region33: #{tpu_custom_call.1} parent=1 // pred_fallthru
      _
    // Predicated region
    $region34: #{tpu_custom_call.1} parent=1 // pred_check
      _
    $region35: #{tpu_custom_call.1} parent=1 // pred_check_branch
      %246 = sbr.rel (0) target = $region37
    $region36: #{tpu_custom_call.1} parent=1 // pred_region
      %247 = dma.done [#allocation5], 16
    $region37: #{tpu_custom_call.1} parent=1 // pred_fallthru
      _
    %248 = vsyncpa [#allocation4], 1
    %249 = vsyncpa [#allocation7], 1
    %250 = vsyncpa [#allocation5], 1

</llo_original>
